<compile_context>
chip_gen: v7x
topology: tpu7x:2x2x1
jax: 0.10.0
libtpu: 0.0.40
codegen_flags: <defaults>
</compile_context>

<pallas_src>
import jax
import jax.numpy as jnp
from jax.experimental import pallas as pl
from jax.experimental.pallas import tpu as pltpu


def _round_up(x, m):
    return (x + m - 1) // m * m


# ----------------------------------------------------------------------------
# Pallas kernel: tiled matmul (accumulate over K directly into the VMEM-resident
# output block) with fused per-output-channel scale/shift (folded BatchNorm or
# conv bias) and optional ReLU epilogue.  Operands are bf16, accumulation f32.
# ----------------------------------------------------------------------------
def _make_matmul_epilogue_kernel(apply_relu):
    def kernel(a_ref, w_ref, scale_ref, shift_ref, o_ref):
        k = pl.program_id(1)
        contrib = jnp.dot(a_ref[...], w_ref[...],
                          preferred_element_type=jnp.float32)

        @pl.when(k == 0)
        def _():
            o_ref[...] = contrib

        @pl.when(k > 0)
        def _():
            o_ref[...] += contrib

        @pl.when(k == pl.num_programs(1) - 1)
        def _():
            y = o_ref[...] * scale_ref[...] + shift_ref[...]
            if apply_relu:
                y = jnp.maximum(y, 0.0)
            o_ref[...] = y

    return kernel


def _pick_tk(Kp, cap=2048):
    """Largest K tile <= cap that evenly divides Kp (Kp is a multiple of 128)."""
    if Kp <= cap:
        return Kp
    for nsteps in range(2, Kp // 128 + 1):
        if Kp % nsteps == 0:
            tk = Kp // nsteps
            if tk <= cap and tk % 128 == 0:
                return tk
    return 128


def matmul_scale_shift(a, w, scale, shift, *, relu):
    """(M,K) @ (K,N) * scale[N] + shift[N], optional ReLU.  bf16 in, f32 out."""
    M, K = a.shape
    K2, N = w.shape
    assert K == K2
    Mp = _round_up(max(M, 16), 16)
    Kp = _round_up(max(K, 128), 128)
    Np = _round_up(max(N, 128), 128)

    # bf16 operands halve weight/activation DMA; epilogue stays in f32.
    a_p = jnp.zeros((Mp, Kp), jnp.bfloat16).at[:M, :K].set(a.astype(jnp.bfloat16))
    w_p = jnp.zeros((Kp, Np), jnp.bfloat16).at[:K, :N].set(w.astype(jnp.bfloat16))
    scale_p = jnp.zeros((1, Np), jnp.float32).at[0, :N].set(scale)
    shift_p = jnp.zeros((1, Np), jnp.float32).at[0, :N].set(shift)

    tk = _pick_tk(Kp)
    tm = 256 if (Mp >= 512 and Mp % 256 == 0) else Mp

    out = pl.pallas_call(
        _make_matmul_epilogue_kernel(relu),
        out_shape=jax.ShapeDtypeStruct((Mp, Np), jnp.float32),
        grid_spec=pltpu.PrefetchScalarGridSpec(
            num_scalar_prefetch=0,
            grid=(Mp // tm, Kp // tk),
            in_specs=[
                pl.BlockSpec((tm, tk), lambda i, k: (i, k)),
                pl.BlockSpec((tk, Np), lambda i, k: (k, 0)),
                pl.BlockSpec((1, Np), lambda i, k: (0, 0)),
                pl.BlockSpec((1, Np), lambda i, k: (0, 0)),
            ],
            out_specs=pl.BlockSpec((tm, Np), lambda i, k: (i, 0)),
        ),
        compiler_params=pltpu.CompilerParams(
            dimension_semantics=("parallel", "arbitrary"),
        ),
    )(a_p, w_p, scale_p, shift_p)
    return out[:M, :N]


# ----------------------------------------------------------------------------
# JAX glue: im2col (with dead-tap pruning), conv wrapper, BN folding,
# PyTorch-style bilinear resize.
# ----------------------------------------------------------------------------
def _im2col(x_nhwc, kh, kw, padding, dilation):
    """im2col.  Taps whose shifted window lies entirely inside the zero padding
    contribute nothing and are pruned (static-shape decision at trace time).
    Returns (patches (M, ntaps*C), kept tap index list)."""
    N, H, W, C = x_nhwc.shape
    xp = x_nhwc
    if padding > 0:
        xp = jnp.pad(
            x_nhwc, ((0, 0), (padding, padding), (padding, padding), (0, 0)))
    cols, kept = [], []
    for ki in range(kh):
        for kj in range(kw):
            r0, c0 = ki * dilation, kj * dilation
            row_live = (r0 < padding + H) and (r0 + H > padding)
            col_live = (c0 < padding + W) and (c0 + W > padding)
            if not (row_live and col_live):
                continue  # pure zero-padding tap
            kept.append((ki, kj))
            cols.append(xp[:, r0:r0 + H, c0:c0 + W, :])
    patches = jnp.stack(cols, axis=3)  # (N,H,W,ntaps,C)
    return patches.reshape(N * H * W, len(kept) * C), kept


def _select_weight_taps(w_oihw, kept):
    """Rows of the matmul weight for the kept taps, ordered (tap, cin)."""
    Cout, Cin, kh, kw = w_oihw.shape
    w_t = jnp.transpose(w_oihw, (2, 3, 1, 0))  # (kh,kw,Cin,Cout)
    w_sel = jnp.stack([w_t[ki, kj] for (ki, kj) in kept], axis=0)
    return w_sel.reshape(len(kept) * Cin, Cout)


def conv2d(x_nhwc, w_oihw, scale, shift, *, padding=0, dilation=1, relu=False):
    """Conv (stride 1) + per-channel scale/shift + optional ReLU via Pallas matmul."""
    N, H, W, C = x_nhwc.shape
    Cout, Cin, kh, kw = w_oihw.shape
    assert Cin == C
    if kh == 1 and kw == 1:
        a = x_nhwc.reshape(N * H * W, C)
        wmat = w_oihw.reshape(Cout, Cin).T
    else:
        a, kept = _im2col(x_nhwc, kh, kw, padding, dilation)
        wmat = _select_weight_taps(w_oihw, kept)
    y = matmul_scale_shift(a, wmat, scale, shift, relu=relu)
    return y.reshape(N, H, W, Cout)


def bn_fold(gamma, beta, mean, var, eps=1e-5):
    scale = gamma / jnp.sqrt(var + eps)
    shift = beta - mean * scale
    return scale, shift


def bilinear_resize(x_nhwc, out_h, out_w):
    """F.interpolate(mode='bilinear', align_corners=False) on NHWC data."""
    N, H, W, C = x_nhwc.shape

    def src_idx(out_size, in_size):
        i = jnp.arange(out_size, dtype=jnp.float32)
        src = (i + 0.5) * (in_size / out_size) - 0.5
        src = jnp.maximum(src, 0.0)
        i0 = jnp.floor(src).astype(jnp.int32)
        i0 = jnp.minimum(i0, in_size - 1)
        i1 = jnp.minimum(i0 + 1, in_size - 1)
        frac = src - i0.astype(jnp.float32)
        return i0, i1, frac

    h0, h1, fh = src_idx(out_h, H)
    w0, w1, fw = src_idx(out_w, W)
    fw_ = fw[None, None, :, None]
    fh_ = fh[None, :, None, None]
    row0 = x_nhwc[:, h0]
    row1 = x_nhwc[:, h1]
    top = row0[:, :, w0] * (1.0 - fw_) + row0[:, :, w1] * fw_
    bot = row1[:, :, w0] * (1.0 - fw_) + row1[:, :, w1] * fw_
    return top * (1.0 - fh_) + bot * fh_


# ----------------------------------------------------------------------------
# Module forward passes built on the Pallas matmul kernel.
# ----------------------------------------------------------------------------
ATROUS_RATES = (12, 24, 36)


def aspp_forward(x_nhwc, p):
    N, H, W, C = x_nhwc.shape
    M = N * H * W
    x_flat = x_nhwc.reshape(M, C)

    branch_outputs = [None] * 5  # b0, b1, b2, b3, pool (PyTorch concat order)

    # Branches that are (or reduce to) 1x1 convs on the raw input get fused into
    # a single wide-N matmul that reads x once.
    fused_w, fused_s, fused_b, fused_idx, fused_cout = [], [], [], [], []

    def add_fused(idx, wmat, scale, shift):
        fused_w.append(wmat)
        fused_s.append(scale)
        fused_b.append(shift)
        fused_idx.append(idx)
        fused_cout.append(wmat.shape[1])

    s, b = bn_fold(*p["b0_bn"])
    add_fused(0, p["b0_w"].reshape(p["b0_w"].shape[0], C).T, s, b)

    for i, rate in enumerate(ATROUS_RATES):
        s, b = bn_fold(*p[f"b{i + 1}_bn"])
        w = p[f"b{i + 1}_w"]
        if rate >= H and rate >= W:
            # Every off-center tap of the dilated 3x3 reads only zero padding:
            # the branch is exactly a 1x1 conv with the center-tap weights.
            add_fused(i + 1, w[:, :, 1, 1].T, s, b)
        else:
            branch_outputs[i + 1] = conv2d(
                x_nhwc, w, s, b, padding=rate, dilation=rate, relu=True)

    wcat = jnp.concatenate(fused_w, axis=1)
    scat = jnp.concatenate(fused_s)
    bcat = jnp.concatenate(fused_b)
    y = matmul_scale_shift(x_flat, wcat, scat, bcat, relu=True)
    off = 0
    for idx, co in zip(fused_idx, fused_cout):
        branch_outputs[idx] = y[:, off:off + co].reshape(N, H, W, co)
        off += co

    # Global-pool branch (AdaptiveAvgPool2d(1) -> 1x1 conv -> BN -> ReLU -> resize).
    pooled = jnp.mean(x_nhwc, axis=(1, 2), keepdims=True)
    s, b = bn_fold(*p["pool_bn"])
    pooled = conv2d(pooled, p["pool_w"], s, b, relu=True)
    branch_outputs[4] = bilinear_resize(pooled, H, W)

    cat = jnp.concatenate(branch_outputs, axis=-1)  # (N,H,W,1280)
    s, b = bn_fold(*p["proj_bn"])
    out = conv2d(cat, p["proj_w"], s, b, relu=True)
    # Dropout(0.5): identity (eval mode).
    return out


def experts_forward(x_nhwc, expert_params_list):
    """All experts fused: one im2col, one wide-N cnn1 matmul, one block-diagonal
    cnn2 matmul.  Returns per-expert outputs in the given order."""
    N, H, W, C = x_nhwc.shape

    # TODO(synk): im2col is materialized in HBM (~6 MB here); an in-kernel
    #             shifted-window accumulation would avoid that but is a small win.
    a, kept = _im2col(x_nhwc, 3, 3, padding=1, dilation=1)
    ntaps = len(kept)

    # cnn1 + bn1 + relu for all experts in one matmul (concat along out-channels).
    w1_list, s_list, b_list, hid_list = [], [], [], []
    for ep in expert_params_list:
        w1_list.append(_select_weight_taps(ep["cnn1_w"], kept))
        s, b = bn_fold(*ep["bn1"])
        s_list.append(s)
        b_list.append(b)
        hid_list.append(ep["cnn1_w"].shape[0])
    w1 = jnp.concatenate(w1_list, axis=1)
    s1 = jnp.concatenate(s_list)
    b1 = jnp.concatenate(b_list)
    h = matmul_scale_shift(a, w1, s1, b1, relu=True)  # (M, sum(hidden))

    # cnn2 (+bias) for all experts via one block-diagonal matmul.
    nclass_list = [ep["cnn2_w"].shape[0] for ep in expert_params_list]
    total_hidden = sum(hid_list)
    total_classes = sum(nclass_list)
    w2_bd = jnp.zeros((total_hidden, total_classes), jnp.float32)
    roff = coff = 0
    for ep, hdim, ncls in zip(expert_params_list, hid_list, nclass_list):
        w2 = ep["cnn2_w"].reshape(ncls, hdim).T  # (hidden, nclass)
        w2_bd = w2_bd.at[roff:roff + hdim, coff:coff + ncls].set(w2)
        roff += hdim
        coff += ncls
    bias2 = jnp.concatenate([ep["cnn2_b"] for ep in expert_params_list])
    ones = jnp.ones((total_classes,), jnp.float32)
    y = matmul_scale_shift(h, w2_bd, ones, bias2, relu=False)

    outs, coff = [], 0
    for ncls in nclass_list:
        outs.append(y[:, coff:coff + ncls].reshape(N, H, W, ncls))
        coff += ncls
    return outs


def mce_forward(feature, params, num_experts=2, use_lws=False, aggregation="mean"):
    low = jnp.transpose(feature["low_level"], (0, 2, 3, 1)).astype(jnp.float32)
    out = jnp.transpose(feature["out"], (0, 2, 3, 1)).astype(jnp.float32)

    s, b = bn_fold(*params["project_bn"])
    low_level_feature = conv2d(low, params["project_w"], s, b, relu=True)

    output_feature = aspp_forward(out, params["aspp"])
    output_feature = bilinear_resize(
        output_feature, low_level_feature.shape[1], low_level_feature.shape[2]
    )
    output_feature = jnp.concatenate([low_level_feature, output_feature], axis=-1)

    expert_names = (["expert_head", "expert_tail"] if num_experts == 2
                    else ["expert_head", "expert_body", "expert_tail"])
    expert_outs = experts_forward(
        output_feature, [params[n] for n in expert_names])
    outs_by_name = dict(zip(expert_names, expert_outs))
    y_head = outs_by_name["expert_head"]
    y_tail = outs_by_name["expert_tail"]
    y_body = outs_by_name.get("expert_body")

    if use_lws:
        head_norm = jnp.linalg.norm(params["expert_head"]["cnn2_w"].reshape(-1))
        f_tail = head_norm / jnp.linalg.norm(
            params["expert_tail"]["cnn2_w"].reshape(-1))
        y_tail = f_tail * y_tail
        if num_experts == 3:
            f_body = head_norm / jnp.linalg.norm(
                params["expert_body"]["cnn2_w"].reshape(-1))
            y_body = f_body * y_body

    outs = [y_head, y_tail] if num_experts == 2 else [y_head, y_body, y_tail]
    # return NCHW to match PyTorch.
    outs = [jnp.transpose(y, (0, 3, 1, 2)) for y in outs]

    aggregator_output = None
    # aggregation in ['mean', 'max_pool'] -> classifier not applied.
    # TODO(synk): MLP/CNN merge/select/moe aggregators are not defined in the
    #             reference source and are not implemented.
    return outs, aggregator_output


# ----------------------------------------------------------------------------
# Deterministic parameter initialization (synthetic, not a checkpoint).
# ----------------------------------------------------------------------------
def init_params(key, num_classes=8, num_experts=2):
    keys = iter(jax.random.split(key, 128))

    def conv_w(cout, cin, k):
        std = (2.0 / (cin * k * k)) ** 0.5
        return std * jax.random.normal(next(keys), (cout, cin, k, k), jnp.float32)

    def bn(c):
        gamma = 1.0 + 0.1 * jax.random.normal(next(keys), (c,), jnp.float32)
        beta = 0.1 * jax.random.normal(next(keys), (c,), jnp.float32)
        mean = 0.1 * jax.random.normal(next(keys), (c,), jnp.float32)
        var = 1.0 + 0.1 * jax.random.uniform(next(keys), (c,), jnp.float32)
        return (gamma, beta, mean, var)

    def expert(in_dim, out_dim, hidden=256):
        return {
            "cnn1_w": conv_w(hidden, in_dim, 3),
            "bn1": bn(hidden),
            "cnn2_w": conv_w(out_dim, hidden, 1),
            "cnn2_b": 0.1 * jax.random.normal(next(keys), (out_dim,), jnp.float32),
        }

    aspp = {
        "b0_w": conv_w(256, 2048, 1), "b0_bn": bn(256),
        "b1_w": conv_w(256, 2048, 3), "b1_bn": bn(256),
        "b2_w": conv_w(256, 2048, 3), "b2_bn": bn(256),
        "b3_w": conv_w(256, 2048, 3), "b3_bn": bn(256),
        "pool_w": conv_w(256, 2048, 1), "pool_bn": bn(256),
        "proj_w": conv_w(256, 5 * 256, 1), "proj_bn": bn(256),
    }
    params = {
        "project_w": conv_w(48, 256, 1),
        "project_bn": bn(48),
        "aspp": aspp,
        "expert_head": expert(304, num_classes),
        "expert_tail": expert(304, num_classes),
    }
    if num_experts == 3:
        params["expert_body"] = expert(304, num_classes)
    return params


if __name__ == "__main__":
    num_classes = 8
    num_experts = 2

    key = jax.random.PRNGKey(0)
    k_params, k_low, k_out = jax.random.split(key, 3)
    params = init_params(k_params, num_classes=num_classes, num_experts=num_experts)

    # PyTorch-convention NCHW inputs (small spatial / batch).
    feature = {
        "low_level": jax.random.normal(k_low, (2, 256, 16, 16), jnp.float32),
        "out": jax.random.normal(k_out, (2, 2048, 4, 4), jnp.float32),
    }

    outs, agg = mce_forward(feature, params,
                            num_experts=num_experts, use_lws=False,
                            aggregation="mean")
    outs = jax.block_until_ready(outs)

    assert len(outs) == num_experts
    for y in outs:
        assert y.shape == (2, num_classes, 16, 16), y.shape
        assert y.dtype == jnp.float32
        assert bool(jnp.all(jnp.isfinite(y)))
    assert agg is None
    print("KERNEL_OK")
</pallas_src>

<mosaic_0001>
module attributes {stable_mosaic.version = 11 : i64} {
  func.func @kernel(%arg0: i32, %arg1: i32, %arg2: memref<256x256xbf16, #tpu.memory_space<vmem>>, %arg3: memref<256x128xbf16, #tpu.memory_space<vmem>>, %arg4: memref<1x128xf32, #tpu.memory_space<vmem>>, %arg5: memref<1x128xf32, #tpu.memory_space<vmem>>, %arg6: memref<256x128xf32, #tpu.memory_space<vmem>>) attributes {dimension_semantics = [#tpu.dimension_semantics<parallel>, #tpu.dimension_semantics<arbitrary>], iteration_bounds = array<i64: 2, 1>, scalar_prefetch = 0 : i64, scratch_operands = 0 : i64, tpu.core_type = #tpu.core_type<tc>, window_params = [{transform_indices = @transform_0, window_bounds = array<i64: 256, 256>}, {transform_indices = @transform_1, window_bounds = array<i64: 256, 128>}, {pipeline_mode = #tpu.pipeline_mode<synchronous>, transform_indices = @transform_2, window_bounds = array<i64: 1, 128>}, {pipeline_mode = #tpu.pipeline_mode<synchronous>, transform_indices = @transform_3, window_bounds = array<i64: 1, 128>}, {transform_indices = @transform_4, window_bounds = array<i64: 256, 128>}]} {
    %c0 = arith.constant 0 : index
    %c0_0 = arith.constant 0 : index
    %0 = vector.load %arg2[%c0, %c0_0] : memref<256x256xbf16, #tpu.memory_space<vmem>>, vector<256x256xbf16>
    %c0_1 = arith.constant 0 : index
    %c0_2 = arith.constant 0 : index
    %1 = vector.load %arg3[%c0_1, %c0_2] : memref<256x128xbf16, #tpu.memory_space<vmem>>, vector<256x128xbf16>
    %cst = arith.constant dense<0.000000e+00> : vector<256x128xf32>
    %2 = tpu.matmul %0, %1, %cst {dimension_numbers = #tpu.dot_dimension_numbers<[1], [0], [0], [1], [0, 0, 1, 1], [], []>} : vector<256x256xbf16>, vector<256x128xbf16>, vector<256x128xf32> -> vector<256x128xf32>
    %c0_i32 = arith.constant 0 : i32
    %3 = arith.cmpi eq, %arg1, %c0_i32 : i32
    %4 = arith.extui %3 : i1 to i32
    %c0_i32_3 = arith.constant 0 : i32
    %5 = arith.cmpi ne, %4, %c0_i32_3 : i32
    scf.if %5 {
      %c0_8 = arith.constant 0 : index
      %c0_9 = arith.constant 0 : index
      %12 = vector.load %arg6[%c0_8, %c0_9] : memref<256x128xf32, #tpu.memory_space<vmem>>, vector<256x128xf32>
      tpu.vector_store %arg6[%c0_8, %c0_9], %2 {strides = array<i32>} : memref<256x128xf32, #tpu.memory_space<vmem>>, vector<256x128xf32>,
    } else {
    }
    %c0_i32_4 = arith.constant 0 : i32
    %6 = arith.cmpi sgt, %arg1, %c0_i32_4 : i32
    %7 = arith.extui %6 : i1 to i32
    %c0_i32_5 = arith.constant 0 : i32
    %8 = arith.cmpi ne, %7, %c0_i32_5 : i32
    scf.if %8 {
      %c0_8 = arith.constant 0 : index
      %c0_9 = arith.constant 0 : index
      %12 = vector.load %arg6[%c0_8, %c0_9] : memref<256x128xf32, #tpu.memory_space<vmem>>, vector<256x128xf32>
      %13 = arith.addf %12, %2 : vector<256x128xf32>
      %c0_10 = arith.constant 0 : index
      %c0_11 = arith.constant 0 : index
      %14 = vector.load %arg6[%c0_10, %c0_11] : memref<256x128xf32, #tpu.memory_space<vmem>>, vector<256x128xf32>
      tpu.vector_store %arg6[%c0_10, %c0_11], %13 {strides = array<i32>} : memref<256x128xf32, #tpu.memory_space<vmem>>, vector<256x128xf32>,
    } else {
    }
    %c0_i32_6 = arith.constant 0 : i32
    %9 = arith.cmpi eq, %arg1, %c0_i32_6 : i32
    %10 = arith.extui %9 : i1 to i32
    %c0_i32_7 = arith.constant 0 : i32
    %11 = arith.cmpi ne, %10, %c0_i32_7 : i32
    scf.if %11 {
      %c0_8 = arith.constant 0 : index
      %c0_9 = arith.constant 0 : index
      %12 = vector.load %arg6[%c0_8, %c0_9] : memref<256x128xf32, #tpu.memory_space<vmem>>, vector<256x128xf32>
      %c0_10 = arith.constant 0 : index
      %c0_11 = arith.constant 0 : index
      %13 = vector.load %arg4[%c0_10, %c0_11] : memref<1x128xf32, #tpu.memory_space<vmem>>, vector<1x128xf32>
      %14 = vector.broadcast %13 : vector<1x128xf32> to vector<256x128xf32>
      %15 = arith.mulf %12, %14 : vector<256x128xf32>
      %c0_12 = arith.constant 0 : index
      %c0_13 = arith.constant 0 : index
      %16 = vector.load %arg5[%c0_12, %c0_13] : memref<1x128xf32, #tpu.memory_space<vmem>>, vector<1x128xf32>
      %17 = vector.broadcast %16 : vector<1x128xf32> to vector<256x128xf32>
      %18 = arith.addf %15, %17 : vector<256x128xf32>
      %cst_14 = arith.constant 0.000000e+00 : f32
      %19 = vector.broadcast %cst_14 : f32 to vector<256x128xf32>
      %20 = arith.maximumf %18, %19 : vector<256x128xf32>
      %c0_15 = arith.constant 0 : index
      %c0_16 = arith.constant 0 : index
      %21 = vector.load %arg6[%c0_15, %c0_16] : memref<256x128xf32, #tpu.memory_space<vmem>>, vector<256x128xf32>
      tpu.vector_store %arg6[%c0_15, %c0_16], %20 {strides = array<i32>} : memref<256x128xf32, #tpu.memory_space<vmem>>, vector<256x128xf32>,
    } else {
    }
    return
  }
  func.func @transform_0(%arg0: i32, %arg1: i32) -> (i32, i32) {
    %c0_i32 = arith.constant 0 : i32
    return %arg0, %arg1 : i32, i32
  }
  func.func @transform_1(%arg0: i32, %arg1: i32) -> (i32, i32) {
    %c0_i32 = arith.constant 0 : i32
    %c0_i32_0 = arith.constant 0 : i32
    return %arg1, %c0_i32 : i32, i32
  }
  func.func @transform_2(%arg0: i32, %arg1: i32) -> (i32, i32) {
    %c0_i32 = arith.constant 0 : i32
    %c0_i32_0 = arith.constant 0 : i32
    %c0_i32_1 = arith.constant 0 : i32
    return %c0_i32, %c0_i32_0 : i32, i32
  }
  func.func @transform_3(%arg0: i32, %arg1: i32) -> (i32, i32) {
    %c0_i32 = arith.constant 0 : i32
    %c0_i32_0 = arith.constant 0 : i32
    %c0_i32_1 = arith.constant 0 : i32
    return %c0_i32, %c0_i32_0 : i32, i32
  }
  func.func @transform_4(%arg0: i32, %arg1: i32) -> (i32, i32) {
    %c0_i32 = arith.constant 0 : i32
    %c0_i32_0 = arith.constant 0 : i32
    return %arg0, %c0_i32 : i32, i32
  }
}

</mosaic_0001>

<llo_original>
// kernel: tpu_custom_call.1
$region0: #{tpu_custom_call.1}
  #allocation0 [shape = 'u32[]', space=smem, size = 0x4, offset = 0x4, fixed_abs, tag = 'smem constant byte address 0x4 - core index']
  #allocation1 [shape = 'u32[144,128]{1,0:T(1,128)}', space=vmem, size = 0x12000, scoped, tag = 'internal scratch']
  %s0 = inlined_call_operand.hbm [shape: bf16[512,256], index: 0, kind: input, shape index: {}]
  %s1 = inlined_call_operand.hbm [shape: bf16[256,128], index: 1, kind: input, shape index: {}]
  %s2 = inlined_call_operand.vmem [shape: f32[1,128], index: 2, kind: input, shape index: {}]
  %s3 = inlined_call_operand.vmem [shape: f32[1,128], index: 3, kind: input, shape index: {}]
  %s4 = inlined_call_operand.hbm [shape: f32[512,128], index: 4, kind: output, shape index: {}]
  %s5 = sld [smem:[#allocation0]]
  $region69: #{tpu_custom_call.1} parent=0
    _
  %s7 = ssub.s32 1, %s5
  %s8 = scalar_select 0, %s7, %s5
  $region1: #{tpu_custom_call.1} parent=0
    #allocation2 [shape = 'u8[262144]{0}', space=vmem, size = 0x40000, scoped, tag = 'input window, operand 0']
    #allocation3 [shape = 's32[2]{0}', space=sflag, size = 0x8, scoped, tag = 'scoped memory for tpu_custom_call.1']
    #allocation4 [shape = 's32[2]{0}', space=sflag, size = 0x8, scoped, tag = 'scoped memory for tpu_custom_call.1']
    #allocation5 [shape = 'u8[65536]{0}', space=vmem, size = 0x10000, scoped, tag = 'input window, operand 1, single buffered']
    #allocation6 [shape = 's32[1]{0}', space=sflag, size = 0x4, scoped, tag = 'scoped memory for tpu_custom_call.1']
    #allocation7 [shape = 'u8[262144]{0}', space=vmem, size = 0x40000, scoped, tag = 'output window, operand 0']
    %9 = vsyncpa [#allocation3], 0
    %s10 = scalar_lea.sflag [#allocation3], 1
    %11 = vsyncpa %s10, 0
    %12 = vsyncpa [#allocation6], 0
    %13 = vsyncpa [#allocation4], 0
    %s14 = scalar_lea.sflag [#allocation4], 1
    %15 = vsyncpa %s14, 0
    loop: start=0, step=1, limit=4
    $region2: #{tpu_custom_call.1} parent=1 // loop_pre_header
      _
    $region3: #{tpu_custom_call.1} parent=1 // loop_header
      %s17 = sphi 0, %s21
      %p18 = scmp.ge.s32.totalorder %s17, 4
      %s24 = sphi 0, %s36
      %s25 = sphi 0, %s32
      %s26 = sphi 0, %s24
      %s27 = sphi 0, %s25
      %s28 = sphi 0, %s26
      %s29 = sphi 0, %s27
      %s41 = sphi 0, %s43
      %s44 = sphi 0, %s41
      %s45 = sphi 0, %s44
      %s61 = sphi 0, %s45
      %s67 = sphi 0, %s69
      %s70 = sphi 0, %s67
      %s71 = sphi 0, %s70
      %s87 = sphi 0, %s71
      %s91 = sphi 0, %s91
      %s93 = sphi 0, %s91
      %s94 = sphi 0, %s93
      %s108 = sphi 0, %s94
      %s112 = sphi 0, %s112
      %s114 = sphi 0, %s112
      %s115 = sphi 0, %s114
      %s129 = sphi 0, %s115
      %s135 = sphi 0, %s137
      %s138 = sphi 0, %s135
      %s139 = sphi 0, %s138
      %s155 = sphi 0, %s139
    $region4: #{tpu_custom_call.1} parent=1 // loop_header_branch
      %20 = sbr.rel (%p18) target = $region8
    $region5: #{tpu_custom_call.1} parent=1 // loop_body
      %s22 = ssub.s32 %s17, 1
      %s23 = ssub.s32 %s17, 2
      %s30 = sadd.s32 1, %s25
      %p31 = scmp.ge.s32.totalorder %s30, 1
      %s32 = scalar_select %p31, 0, %s30
      %s33 = sadd.s32 1, %s24
      %s34 = scalar_select %p31, %s33, %s24
      %p35 = scmp.ge.s32.totalorder %s34, 2
      %s36 = scalar_select %p35, 0, %s34
      %s37 = ssub.s32 %s24, %s36
      %s38 = ssub.s32 %s25, %s32
      %s39 = sor.u32 %s37, %s38
      %p40 = scmp.eq.s32.totalorder %s39, 0
      %s42 = sadd.s32 %s41, 1
      %s43 = scalar_select %p40, %s41, %s42
      %p46 = pneg %p40
      %p47 = scmp.eq.s32.totalorder %s17, 1
      %p48 = por %p46, %p47
      %p49 = scmp.ne.s32.totalorder %s41, %s44
      %p50 = scmp.eq.s32.totalorder %s17, 0
      %p51 = por %p49, %p50
      %p52 = scmp.ne.s32.totalorder %s41, %s44
      %p53 = scmp.eq.s32.totalorder %s22, 1
      %p54 = por %p52, %p53
      %p55 = scmp.ne.s32.totalorder %s44, %s45
      %p56 = scmp.eq.s32.totalorder %s22, 0
      %p57 = por %p55, %p56
      %p58 = scmp.ne.s32.totalorder %s44, %s45
      %p59 = scmp.eq.s32.totalorder %s23, 1
      %p60 = por %p58, %p59
      %p62 = scmp.ne.s32.totalorder %s45, %s61
      %p63 = scmp.eq.s32.totalorder %s23, 0
      %p64 = por %p62, %p63
      %s65 = ssub.s32 %s25, %s32
      %p66 = scmp.eq.s32.totalorder %s65, 0
      %s68 = sadd.s32 %s67, 1
      %s69 = scalar_select %p66, %s67, %s68
      %p72 = pneg %p66
      %p73 = scmp.eq.s32.totalorder %s17, 1
      %p74 = por %p72, %p73
      %p75 = scmp.ne.s32.totalorder %s67, %s70
      %p76 = scmp.eq.s32.totalorder %s17, 0
      %p77 = por %p75, %p76
      %p78 = scmp.ne.s32.totalorder %s67, %s70
      %p79 = scmp.eq.s32.totalorder %s22, 1
      %p80 = por %p78, %p79
      %p81 = scmp.ne.s32.totalorder %s70, %s71
      %p82 = scmp.eq.s32.totalorder %s22, 0
      %p83 = por %p81, %p82
      %p84 = scmp.ne.s32.totalorder %s70, %s71
      %p85 = scmp.eq.s32.totalorder %s23, 1
      %p86 = por %p84, %p85
      %p88 = scmp.ne.s32.totalorder %s71, %s87
      %p89 = scmp.eq.s32.totalorder %s23, 0
      %p90 = por %p88, %p89
      %s92 = sadd.s32 %s91, 1
      %p95 = scmp.eq.s32.totalorder %s17, 1
      %p96 = scmp.ne.s32.totalorder %s91, %s93
      %p97 = scmp.eq.s32.totalorder %s17, 0
      %p98 = por %p96, %p97
      %p99 = scmp.ne.s32.totalorder %s91, %s93
      %p100 = scmp.eq.s32.totalorder %s22, 1
      %p101 = por %p99, %p100
      %p102 = scmp.ne.s32.totalorder %s93, %s94
      %p103 = scmp.eq.s32.totalorder %s22, 0
      %p104 = por %p102, %p103
      %p105 = scmp.ne.s32.totalorder %s93, %s94
      %p106 = scmp.eq.s32.totalorder %s23, 1
      %p107 = por %p105, %p106
      %p109 = scmp.ne.s32.totalorder %s94, %s108
      %p110 = scmp.eq.s32.totalorder %s23, 0
      %p111 = por %p109, %p110
      %s113 = sadd.s32 %s112, 1
      %p116 = scmp.eq.s32.totalorder %s17, 1
      %p117 = scmp.ne.s32.totalorder %s112, %s114
      %p118 = scmp.eq.s32.totalorder %s17, 0
      %p119 = por %p117, %p118
      %p120 = scmp.ne.s32.totalorder %s112, %s114
      %p121 = scmp.eq.s32.totalorder %s22, 1
      %p122 = por %p120, %p121
      %p123 = scmp.ne.s32.totalorder %s114, %s115
      %p124 = scmp.eq.s32.totalorder %s22, 0
      %p125 = por %p123, %p124
      %p126 = scmp.ne.s32.totalorder %s114, %s115
      %p127 = scmp.eq.s32.totalorder %s23, 1
      %p128 = por %p126, %p127
      %p130 = scmp.ne.s32.totalorder %s115, %s129
      %p131 = scmp.eq.s32.totalorder %s23, 0
      %p132 = por %p130, %p131
      %s133 = ssub.s32 %s24, %s36
      %p134 = scmp.eq.s32.totalorder %s133, 0
      %s136 = sadd.s32 %s135, 1
      %s137 = scalar_select %p134, %s135, %s136
      %p140 = pneg %p134
      %p141 = scmp.eq.s32.totalorder %s17, 1
      %p142 = por %p140, %p141
      %p143 = scmp.ne.s32.totalorder %s135, %s138
      %p144 = scmp.eq.s32.totalorder %s17, 0
      %p145 = por %p143, %p144
      %p146 = scmp.ne.s32.totalorder %s135, %s138
      %p147 = scmp.eq.s32.totalorder %s22, 1
      %p148 = por %p146, %p147
      %p149 = scmp.ne.s32.totalorder %s138, %s139
      %p150 = scmp.eq.s32.totalorder %s22, 0
      %p151 = por %p149, %p150
      %p152 = scmp.ne.s32.totalorder %s138, %s139
      %p153 = scmp.eq.s32.totalorder %s23, 1
      %p154 = por %p152, %p153
      %p156 = scmp.ne.s32.totalorder %s139, %s155
      %p157 = scmp.eq.s32.totalorder %s23, 0
      %p158 = por %p156, %p157
      %p159 = scmp.le.s32.totalorder 1, %s17
      %p160 = scmp.lt.s32.totalorder %s17, 3
      %p161 = pnand %p159, %p160
      %p162 = pneg %p161
      // Predicated region
      $region9: #{tpu_custom_call.1} parent=5 // pred_check
        _
      $region10: #{tpu_custom_call.1} parent=5 // pred_check_branch
        %164 = sbr.rel (%p161) target = $region12
      $region11: #{tpu_custom_call.1} parent=5 // pred_region
        %s165 = ssub.s32 %s17, 1
        // Predicated region
        $region13: #{tpu_custom_call.1} parent=11 // pred_check
          %p166 = pneg %p83
        $region14: #{tpu_custom_call.1} parent=11 // pred_check_branch
          %168 = sbr.rel (%p166) target = $region16
        $region15: #{tpu_custom_call.1} parent=11 // pred_region
          %s169 = smul.u32 32, %s27
          %s171 = ssub.s32 2048, 2048
          %172 = vsyncadd [#allocation6], %s171
          %s173 = smul.addr %s169, 64
          %s174 = scalar_lea.hbm %s1, %s173
          %s175 = sshll.u32 [#allocation5], 4
          %s176 = int_to_ptr.vmem [resolvable:$true] %s175
          %181 = dma.hbm_to_vmem [thread:$0]  %s174, 2048, %s176, [#allocation6], 64, 64, 4
        $region16: #{tpu_custom_call.1} parent=11 // pred_fallthru
          _
        // Predicated region
        $region17: #{tpu_custom_call.1} parent=11 // pred_check
          %p182 = pneg %p104
        $region18: #{tpu_custom_call.1} parent=11 // pred_check_branch
          %184 = sbr.rel (%p182) target = $region20
        $region19: #{tpu_custom_call.1} parent=11 // pred_region
          _
        $region20: #{tpu_custom_call.1} parent=11 // pred_fallthru
          _
        // Predicated region
        $region21: #{tpu_custom_call.1} parent=11 // pred_check
          %p185 = pneg %p125
        $region22: #{tpu_custom_call.1} parent=11 // pred_check_branch
          %187 = sbr.rel (%p185) target = $region24
        $region23: #{tpu_custom_call.1} parent=11 // pred_region
          _
        $region24: #{tpu_custom_call.1} parent=11 // pred_fallthru
          _
      $region12: #{tpu_custom_call.1} parent=5 // pred_fallthru
        _
      %p188 = scmp.lt.s32.totalorder %s17, 2
      // Predicated region
      $region25: #{tpu_custom_call.1} parent=5 // pred_check
        %p189 = pneg %p188
      $region26: #{tpu_custom_call.1} parent=5 // pred_check_branch
        %191 = sbr.rel (%p189) target = $region28
      $region27: #{tpu_custom_call.1} parent=5 // pred_region
        // Predicated region
        $region29: #{tpu_custom_call.1} parent=27 // pred_check
          %p192 = pneg %p51
        $region30: #{tpu_custom_call.1} parent=27 // pred_check_branch
          %194 = sbr.rel (%p192) target = $region32
        $region31: #{tpu_custom_call.1} parent=27 // pred_region
          %s195 = sand.u32 %s41, 1
          %s196 = scalar_lea.sflag [#allocation3], %s195
          %s197 = sand.u32 %s41, 1
          %s198 = smul.addr %s197, 256
          %s199 = scalar_lea.vmem [#allocation2], %s198
          %s200 = smul.u32 32, %s24
          %s201 = smul.u32 2, %s25
          %s203 = ssub.s32 4096, 4096
          %204 = vsyncadd %s196, %s203
          %s205 = smul.addr %s200, 2
          %s206 = sadd.s32 %s201, %s205
          %s207 = smul.addr %s206, 64
          %s208 = scalar_lea.hbm %s0, %s207
          %s209 = sshll.u32 %s199, 4
          %s210 = int_to_ptr.vmem [resolvable:$true] %s209
          %215 = dma.hbm_to_vmem [thread:$0]  %s208, 4096, %s210, %s196, 128, 128, 8
        $region32: #{tpu_custom_call.1} parent=27 // pred_fallthru
          _
      $region28: #{tpu_custom_call.1} parent=5 // pred_fallthru
        _
      %p216 = scmp.le.s32.totalorder 1, %s17
      %p217 = scmp.lt.s32.totalorder %s17, 3
      %p218 = pnand %p216, %p217
      %p219 = pneg %p218
      // Predicated region
      $region33: #{tpu_custom_call.1} parent=5 // pred_check
        _
      $region34: #{tpu_custom_call.1} parent=5 // pred_check_branch
        %221 = sbr.rel (%p218) target = $region36
      $region35: #{tpu_custom_call.1} parent=5 // pred_region
        %s222 = ssub.s32 %s17, 1
        %s223 = sand.u32 %s44, 1
        %s224 = scalar_lea.sflag [#allocation3], %s223
        %s225 = sand.u32 %s44, 1
        %s226 = smul.addr %s225, 256
        %s227 = scalar_lea.vmem [#allocation2], %s226
        // Predicated region
        $region37: #{tpu_custom_call.1} parent=35 // pred_check
          %p228 = pneg %p57
        $region38: #{tpu_custom_call.1} parent=35 // pred_check_branch
          %230 = sbr.rel (%p228) target = $region40
        $region39: #{tpu_custom_call.1} parent=35 // pred_region
          %231 = dma.done %s224, 4096
        $region40: #{tpu_custom_call.1} parent=35 // pred_fallthru
          _
        // Predicated region
        $region41: #{tpu_custom_call.1} parent=35 // pred_check
          %p232 = pneg %p83
        $region42: #{tpu_custom_call.1} parent=35 // pred_check_branch
          %234 = sbr.rel (%p232) target = $region44
        $region43: #{tpu_custom_call.1} parent=35 // pred_region
          %235 = dma.done [#allocation6], 2048
        $region44: #{tpu_custom_call.1} parent=35 // pred_fallthru
          _
        %s236 = sand.u32 %s44, 1
        %s237 = scalar_lea.sflag [#allocation3], %s236
        %s238 = sand.u32 %s44, 1
        %s239 = smul.addr %s238, 256
        %s240 = scalar_lea.vmem [#allocation2], %s239
        %p241 = pneg %p57
        %p242 = pneg %p54
        %p243 = pneg %p83
        %p244 = pneg %p80
        %p245 = pneg %p104
        %p246 = pneg %p101
        %p247 = pneg %p125
        %p248 = pneg %p122
        %p249 = pneg %p151
        %p250 = pneg %p148
        %s251 = sand.u32 %s138, 1
        %s252 = scalar_lea.sflag [#allocation4], %s251
        %s253 = sand.u32 %s138, 1
        %s254 = smul.addr %s253, 256
        %s255 = scalar_lea.vmem [#allocation7], %s254
        %s256 = smul.u32 32, %s26
        %s257 = smul.u32 2, %s27
        %s258 = smul.u32 32, %s27
        %s259 = smul.u32 32, %s26
        %v261 = vld [vmem:[%s227] sm:$0xff]
        %v262 = vld [vmem:[%s227 + $0x8] sm:$0xff]
        %v263 = vld [vmem:[%s227 + $0x10] sm:$0xff]
        %v264 = vld [vmem:[%s227 + $0x18] sm:$0xff]
        %v265 = vld [vmem:[%s227 + $0x20] sm:$0xff]
        %v266 = vld [vmem:[%s227 + $0x28] sm:$0xff]
        %v267 = vld [vmem:[%s227 + $0x30] sm:$0xff]
        %v268 = vld [vmem:[%s227 + $0x38] sm:$0xff]
        %v269 = vld [vmem:[%s227 + $0x40] sm:$0xff]
        %v270 = vld [vmem:[%s227 + $0x48] sm:$0xff]
        %v271 = vld [vmem:[%s227 + $0x50] sm:$0xff]
        %v272 = vld [vmem:[%s227 + $0x58] sm:$0xff]
        %v273 = vld [vmem:[%s227 + $0x60] sm:$0xff]
        %v274 = vld [vmem:[%s227 + $0x68] sm:$0xff]
        %v275 = vld [vmem:[%s227 + $0x70] sm:$0xff]
        %v276 = vld [vmem:[%s227 + $0x78] sm:$0xff]
        %v277 = vld [vmem:[%s227 + $0x80] sm:$0xff]
        %v278 = vld [vmem:[%s227 + $0x88] sm:$0xff]
        %v279 = vld [vmem:[%s227 + $0x90] sm:$0xff]
        %v280 = vld [vmem:[%s227 + $0x98] sm:$0xff]
        %v281 = vld [vmem:[%s227 + $0xa0] sm:$0xff]
        %v282 = vld [vmem:[%s227 + $0xa8] sm:$0xff]
        %v283 = vld [vmem:[%s227 + $0xb0] sm:$0xff]
        %v284 = vld [vmem:[%s227 + $0xb8] sm:$0xff]
        %v285 = vld [vmem:[%s227 + $0xc0] sm:$0xff]
        %v286 = vld [vmem:[%s227 + $0xc8] sm:$0xff]
        %v287 = vld [vmem:[%s227 + $0xd0] sm:$0xff]
        %v288 = vld [vmem:[%s227 + $0xd8] sm:$0xff]
        %v289 = vld [vmem:[%s227 + $0xe0] sm:$0xff]
        %v290 = vld [vmem:[%s227 + $0xe8] sm:$0xff]
        %v291 = vld [vmem:[%s227 + $0xf0] sm:$0xff]
        %v292 = vld [vmem:[%s227 + $0xf8] sm:$0xff]
        %v293 = vld [vmem:[#allocation5] sm:$0xf]
        %v294 = vld [vmem:[#allocation5 + $0x4] sm:$0xf]
        %v295 = vld [vmem:[#allocation5 + $0x8] sm:$0xf]
        %v296 = vld [vmem:[#allocation5 + $0xc] sm:$0xf]
        %v297 = vld [vmem:[#allocation5 + $0x10] sm:$0xf]
        %v298 = vld [vmem:[#allocation5 + $0x14] sm:$0xf]
        %v299 = vld [vmem:[#allocation5 + $0x18] sm:$0xf]
        %v300 = vld [vmem:[#allocation5 + $0x1c] sm:$0xf]
        %v301 = vld [vmem:[#allocation5 + $0x20] sm:$0xf]
        %v302 = vld [vmem:[#allocation5 + $0x24] sm:$0xf]
        %v303 = vld [vmem:[#allocation5 + $0x28] sm:$0xf]
        %v304 = vld [vmem:[#allocation5 + $0x2c] sm:$0xf]
        %v305 = vld [vmem:[#allocation5 + $0x30] sm:$0xf]
        %v306 = vld [vmem:[#allocation5 + $0x34] sm:$0xf]
        %v307 = vld [vmem:[#allocation5 + $0x38] sm:$0xf]
        %v308 = vld [vmem:[#allocation5 + $0x3c] sm:$0xf]
        %v309 = vld [vmem:[#allocation5 + $0x40] sm:$0xf]
        %v310 = vld [vmem:[#allocation5 + $0x44] sm:$0xf]
        %v311 = vld [vmem:[#allocation5 + $0x48] sm:$0xf]
        %v312 = vld [vmem:[#allocation5 + $0x4c] sm:$0xf]
        %v313 = vld [vmem:[#allocation5 + $0x50] sm:$0xf]
        %v314 = vld [vmem:[#allocation5 + $0x54] sm:$0xf]
        %v315 = vld [vmem:[#allocation5 + $0x58] sm:$0xf]
        %v316 = vld [vmem:[#allocation5 + $0x5c] sm:$0xf]
        %v317 = vld [vmem:[#allocation5 + $0x60] sm:$0xf]
        %v318 = vld [vmem:[#allocation5 + $0x64] sm:$0xf]
        %v319 = vld [vmem:[#allocation5 + $0x68] sm:$0xf]
        %v320 = vld [vmem:[#allocation5 + $0x6c] sm:$0xf]
        %v321 = vld [vmem:[#allocation5 + $0x70] sm:$0xf]
        %v322 = vld [vmem:[#allocation5 + $0x74] sm:$0xf]
        %v323 = vld [vmem:[#allocation5 + $0x78] sm:$0xf]
        %v324 = vld [vmem:[#allocation5 + $0x7c] sm:$0xf]
        %v357 = vunpack.c.l.b16 %v261
        %v358 = vunpack.c.h.b16 %v261
        %v359 = vunpack.c.l.b16 %v262
        %v360 = vunpack.c.h.b16 %v262
        %v361 = vunpack.c.l.b16 %v263
        %v362 = vunpack.c.h.b16 %v263
        %v363 = vunpack.c.l.b16 %v264
        %v364 = vunpack.c.h.b16 %v264
        %v365 = vunpack.c.l.b16 %v265
        %v366 = vunpack.c.h.b16 %v265
        %v367 = vunpack.c.l.b16 %v266
        %v368 = vunpack.c.h.b16 %v266
        %v369 = vunpack.c.l.b16 %v267
        %v370 = vunpack.c.h.b16 %v267
        %v371 = vunpack.c.l.b16 %v268
        %v372 = vunpack.c.h.b16 %v268
        %v373 = vunpack.c.l.b16 %v269
        %v374 = vunpack.c.h.b16 %v269
        %v375 = vunpack.c.l.b16 %v270
        %v376 = vunpack.c.h.b16 %v270
        %v377 = vunpack.c.l.b16 %v271
        %v378 = vunpack.c.h.b16 %v271
        %v379 = vunpack.c.l.b16 %v272
        %v380 = vunpack.c.h.b16 %v272
        %v381 = vunpack.c.l.b16 %v273
        %v382 = vunpack.c.h.b16 %v273
        %v383 = vunpack.c.l.b16 %v274
        %v384 = vunpack.c.h.b16 %v274
        %v385 = vunpack.c.l.b16 %v275
        %v386 = vunpack.c.h.b16 %v275
        %v387 = vunpack.c.l.b16 %v276
        %v388 = vunpack.c.h.b16 %v276
        %v389 = vunpack.c.l.b16 %v277
        %v390 = vunpack.c.h.b16 %v277
        %v391 = vunpack.c.l.b16 %v278
        %v392 = vunpack.c.h.b16 %v278
        %v393 = vunpack.c.l.b16 %v279
        %v394 = vunpack.c.h.b16 %v279
        %v395 = vunpack.c.l.b16 %v280
        %v396 = vunpack.c.h.b16 %v280
        %v397 = vunpack.c.l.b16 %v281
        %v398 = vunpack.c.h.b16 %v281
        %v399 = vunpack.c.l.b16 %v282
        %v400 = vunpack.c.h.b16 %v282
        %v401 = vunpack.c.l.b16 %v283
        %v402 = vunpack.c.h.b16 %v283
        %v403 = vunpack.c.l.b16 %v284
        %v404 = vunpack.c.h.b16 %v284
        %v405 = vunpack.c.l.b16 %v285
        %v406 = vunpack.c.h.b16 %v285
        %v407 = vunpack.c.l.b16 %v286
        %v408 = vunpack.c.h.b16 %v286
        %v409 = vunpack.c.l.b16 %v287
        %v410 = vunpack.c.h.b16 %v287
        %v411 = vunpack.c.l.b16 %v288
        %v412 = vunpack.c.h.b16 %v288
        %v413 = vunpack.c.l.b16 %v289
        %v414 = vunpack.c.h.b16 %v289
        %v415 = vunpack.c.l.b16 %v290
        %v416 = vunpack.c.h.b16 %v290
        %v417 = vunpack.c.l.b16 %v291
        %v418 = vunpack.c.h.b16 %v291
        %v419 = vunpack.c.l.b16 %v292
        %v420 = vunpack.c.h.b16 %v292
        %v421 = vpack.c.b16 %v359, %v357
        %v422 = vpack.c.b16 %v360, %v358
        %v423 = vpack.c.b16 %v363, %v361
        %v424 = vpack.c.b16 %v364, %v362
        %v425 = vpack.c.b16 %v367, %v365
        %v426 = vpack.c.b16 %v368, %v366
        %v427 = vpack.c.b16 %v371, %v369
        %v428 = vpack.c.b16 %v372, %v370
        %v429 = vpack.c.b16 %v375, %v373
        %v430 = vpack.c.b16 %v376, %v374
        %v431 = vpack.c.b16 %v379, %v377
        %v432 = vpack.c.b16 %v380, %v378
        %v433 = vpack.c.b16 %v383, %v381
        %v434 = vpack.c.b16 %v384, %v382
        %v435 = vpack.c.b16 %v387, %v385
        %v436 = vpack.c.b16 %v388, %v386
        %v437 = vpack.c.b16 %v391, %v389
        %v438 = vpack.c.b16 %v392, %v390
        %v439 = vpack.c.b16 %v395, %v393
        %v440 = vpack.c.b16 %v396, %v394
        %v441 = vpack.c.b16 %v399, %v397
        %v442 = vpack.c.b16 %v400, %v398
        %v443 = vpack.c.b16 %v403, %v401
        %v444 = vpack.c.b16 %v404, %v402
        %v445 = vpack.c.b16 %v407, %v405
        %v446 = vpack.c.b16 %v408, %v406
        %v447 = vpack.c.b16 %v411, %v409
        %v448 = vpack.c.b16 %v412, %v410
        %v449 = vpack.c.b16 %v415, %v413
        %v450 = vpack.c.b16 %v416, %v414
        %v451 = vpack.c.b16 %v419, %v417
        %v452 = vpack.c.b16 %v420, %v418
        %v517 = vunpack.c.l.b16 %v293
        %v518 = vunpack.c.l.b16 %v294
        %v519 = vunpack.c.l.b16 %v295
        %v520 = vunpack.c.l.b16 %v296
        %v521 = vunpack.c.l.b16 %v297
        %v522 = vunpack.c.l.b16 %v298
        %v523 = vunpack.c.l.b16 %v299
        %v524 = vunpack.c.l.b16 %v300
        %v525 = vunpack.c.l.b16 %v301
        %v526 = vunpack.c.l.b16 %v302
        %v527 = vunpack.c.l.b16 %v303
        %v528 = vunpack.c.l.b16 %v304
        %v529 = vunpack.c.l.b16 %v305
        %v530 = vunpack.c.l.b16 %v306
        %v531 = vunpack.c.l.b16 %v307
        %v532 = vunpack.c.l.b16 %v308
        %v533 = vunpack.c.l.b16 %v309
        %v534 = vunpack.c.l.b16 %v310
        %v535 = vunpack.c.l.b16 %v311
        %v536 = vunpack.c.l.b16 %v312
        %v537 = vunpack.c.l.b16 %v313
        %v538 = vunpack.c.l.b16 %v314
        %v539 = vunpack.c.l.b16 %v315
        %v540 = vunpack.c.l.b16 %v316
        %v541 = vunpack.c.l.b16 %v317
        %v542 = vunpack.c.l.b16 %v318
        %v543 = vunpack.c.l.b16 %v319
        %v544 = vunpack.c.l.b16 %v320
        %v545 = vunpack.c.l.b16 %v321
        %v546 = vunpack.c.l.b16 %v322
        %v547 = vunpack.c.l.b16 %v323
        %v548 = vunpack.c.l.b16 %v324
        %v549 = vpack.c.b16 %v518, %v517
        %v550 = vpack.c.b16 %v520, %v519
        %v551 = vpack.c.b16 %v522, %v521
        %v552 = vpack.c.b16 %v524, %v523
        %v553 = vpack.c.b16 %v526, %v525
        %v554 = vpack.c.b16 %v528, %v527
        %v555 = vpack.c.b16 %v530, %v529
        %v556 = vpack.c.b16 %v532, %v531
        %v557 = vpack.c.b16 %v534, %v533
        %v558 = vpack.c.b16 %v536, %v535
        %v559 = vpack.c.b16 %v538, %v537
        %v560 = vpack.c.b16 %v540, %v539
        %v561 = vpack.c.b16 %v542, %v541
        %v562 = vpack.c.b16 %v544, %v543
        %v563 = vpack.c.b16 %v546, %v545
        %v564 = vpack.c.b16 %v548, %v547
        %581 = vmatprep.subr.bf16.mxu0 0
        %582 = vmatpush1.bf16.msra.mxu0 %v549
        %583 = vmatprep.subr.bf16.mxu0 0
        %584 = vmatpush1.bf16.msra.mxu0 %v550
        %585 = vmatprep.subr.bf16.mxu0 0
        %586 = vmatpush1.bf16.msra.mxu0 %v551
        %587 = vmatprep.subr.bf16.mxu0 0
        %588 = vmatpush1.bf16.msra.mxu0 %v552
        %589 = vmatprep.subr.bf16.mxu0 0
        %590 = vmatpush1.bf16.msra.mxu0 %v553
        %591 = vmatprep.subr.bf16.mxu0 0
        %592 = vmatpush1.bf16.msra.mxu0 %v554
        %593 = vmatprep.subr.bf16.mxu0 0
        %594 = vmatpush1.bf16.msra.mxu0 %v555
        %595 = vmatprep.subr.bf16.mxu0 0
        %596 = vmatpush1.bf16.msra.mxu0 %v556
        %597 = vmatprep.subr.bf16.mxu0 0
        %598 = vmatpush1.bf16.msra.mxu0 %v557
        %599 = vmatprep.subr.bf16.mxu0 0
        %600 = vmatpush1.bf16.msra.mxu0 %v558
        %601 = vmatprep.subr.bf16.mxu0 0
        %602 = vmatpush1.bf16.msra.mxu0 %v559
        %603 = vmatprep.subr.bf16.mxu0 0
        %604 = vmatpush1.bf16.msra.mxu0 %v560
        %605 = vmatprep.subr.bf16.mxu0 0
        %606 = vmatpush1.bf16.msra.mxu0 %v561
        %607 = vmatprep.subr.bf16.mxu0 0
        %608 = vmatpush1.bf16.msra.mxu0 %v562
        %609 = vmatprep.subr.bf16.mxu0 0
        %610 = vmatpush1.bf16.msra.mxu0 %v563
        %611 = vmatprep.subr.bf16.mxu0 0
        %612 = vmatpush1.bf16.msra.mxu0 %v564
        %613 = vmatprep.mubr.bf16.mxu0 %v422
        %614 = vmatmul.mubr.bf16.gmra.mrb[0].mxu0 %v421
        %v615 = vpop.f32.mrb[0].mxu0
        %v616 = vadd.f32 0.0, %v615
        %v617 = vpop.f32.mrb[0].mxu0
        %v618 = vpop.f32.mrb[0].mxu0
        %v619 = vadd.f32 0.0, %v618
        %v620 = vpop.f32.mrb[0].mxu0
        %621 = vmatprep.mubr.bf16.mxu0 %v424
        %622 = vmatmul.mubr.bf16.gmra.mrb[0].mxu0 %v423
        %v623 = vpop.f32.mrb[0].mxu0
        %v624 = vadd.f32 0.0, %v623
        %v625 = vpop.f32.mrb[0].mxu0
        %v626 = vpop.f32.mrb[0].mxu0
        %v627 = vadd.f32 0.0, %v626
        %v628 = vpop.f32.mrb[0].mxu0
        %629 = vmatprep.mubr.bf16.mxu0 %v426
        %630 = vmatmul.mubr.bf16.gmra.mrb[0].mxu0 %v425
        %v631 = vpop.f32.mrb[0].mxu0
        %v632 = vadd.f32 0.0, %v631
        %v633 = vpop.f32.mrb[0].mxu0
        %v634 = vpop.f32.mrb[0].mxu0
        %v635 = vadd.f32 0.0, %v634
        %v636 = vpop.f32.mrb[0].mxu0
        %637 = vmatprep.mubr.bf16.mxu0 %v428
        %638 = vmatmul.mubr.bf16.gmra.mrb[0].mxu0 %v427
        %v639 = vpop.f32.mrb[0].mxu0
        %v640 = vadd.f32 0.0, %v639
        %v641 = vpop.f32.mrb[0].mxu0
        %v642 = vpop.f32.mrb[0].mxu0
        %v643 = vadd.f32 0.0, %v642
        %v644 = vpop.f32.mrb[0].mxu0
        %645 = vmatprep.mubr.bf16.mxu0 %v430
        %646 = vmatmul.mubr.bf16.gmra.mrb[0].mxu0 %v429
        %v647 = vpop.f32.mrb[0].mxu0
        %v648 = vadd.f32 0.0, %v647
        %v649 = vpop.f32.mrb[0].mxu0
        %v650 = vpop.f32.mrb[0].mxu0
        %v651 = vadd.f32 0.0, %v650
        %v652 = vpop.f32.mrb[0].mxu0
        %653 = vmatprep.mubr.bf16.mxu0 %v432
        %654 = vmatmul.mubr.bf16.gmra.mrb[0].mxu0 %v431
        %v655 = vpop.f32.mrb[0].mxu0
        %v656 = vadd.f32 0.0, %v655
        %v657 = vpop.f32.mrb[0].mxu0
        %v658 = vpop.f32.mrb[0].mxu0
        %v659 = vadd.f32 0.0, %v658
        %v660 = vpop.f32.mrb[0].mxu0
        %661 = vmatprep.mubr.bf16.mxu0 %v434
        %662 = vmatmul.mubr.bf16.gmra.mrb[0].mxu0 %v433
        %v663 = vpop.f32.mrb[0].mxu0
        %v664 = vadd.f32 0.0, %v663
        %v665 = vpop.f32.mrb[0].mxu0
        %v666 = vpop.f32.mrb[0].mxu0
        %v667 = vadd.f32 0.0, %v666
        %v668 = vpop.f32.mrb[0].mxu0
        %669 = vmatprep.mubr.bf16.mxu0 %v436
        %670 = vmatmul.mubr.bf16.gmra.mrb[0].mxu0 %v435
        %v671 = vpop.f32.mrb[0].mxu0
        %v672 = vadd.f32 0.0, %v671
        %v673 = vpop.f32.mrb[0].mxu0
        %v674 = vpop.f32.mrb[0].mxu0
        %v675 = vadd.f32 0.0, %v674
        %v676 = vpop.f32.mrb[0].mxu0
        %677 = vmatprep.mubr.bf16.mxu0 %v438
        %678 = vmatmul.mubr.bf16.gmra.mrb[0].mxu0 %v437
        %v679 = vpop.f32.mrb[0].mxu0
        %v680 = vadd.f32 0.0, %v679
        %v681 = vpop.f32.mrb[0].mxu0
        %v682 = vpop.f32.mrb[0].mxu0
        %v683 = vadd.f32 0.0, %v682
        %v684 = vpop.f32.mrb[0].mxu0
        %685 = vmatprep.mubr.bf16.mxu0 %v440
        %686 = vmatmul.mubr.bf16.gmra.mrb[0].mxu0 %v439
        %v687 = vpop.f32.mrb[0].mxu0
        %v688 = vadd.f32 0.0, %v687
        %v689 = vpop.f32.mrb[0].mxu0
        %v690 = vpop.f32.mrb[0].mxu0
        %v691 = vadd.f32 0.0, %v690
        %v692 = vpop.f32.mrb[0].mxu0
        %693 = vmatprep.mubr.bf16.mxu0 %v442
        %694 = vmatmul.mubr.bf16.gmra.mrb[0].mxu0 %v441
        %v695 = vpop.f32.mrb[0].mxu0
        %v696 = vadd.f32 0.0, %v695
        %v697 = vpop.f32.mrb[0].mxu0
        %v698 = vpop.f32.mrb[0].mxu0
        %v699 = vadd.f32 0.0, %v698
        %v700 = vpop.f32.mrb[0].mxu0
        %701 = vmatprep.mubr.bf16.mxu0 %v444
        %702 = vmatmul.mubr.bf16.gmra.mrb[0].mxu0 %v443
        %v703 = vpop.f32.mrb[0].mxu0
        %v704 = vadd.f32 0.0, %v703
        %v705 = vpop.f32.mrb[0].mxu0
        %v706 = vpop.f32.mrb[0].mxu0
        %v707 = vadd.f32 0.0, %v706
        %v708 = vpop.f32.mrb[0].mxu0
        %709 = vmatprep.mubr.bf16.mxu0 %v446
        %710 = vmatmul.mubr.bf16.gmra.mrb[0].mxu0 %v445
        %v711 = vpop.f32.mrb[0].mxu0
        %v712 = vadd.f32 0.0, %v711
        %v713 = vpop.f32.mrb[0].mxu0
        %v714 = vpop.f32.mrb[0].mxu0
        %v715 = vadd.f32 0.0, %v714
        %v716 = vpop.f32.mrb[0].mxu0
        %717 = vmatprep.mubr.bf16.mxu0 %v448
        %718 = vmatmul.mubr.bf16.gmra.mrb[0].mxu0 %v447
        %v719 = vpop.f32.mrb[0].mxu0
        %v720 = vadd.f32 0.0, %v719
        %v721 = vpop.f32.mrb[0].mxu0
        %v722 = vpop.f32.mrb[0].mxu0
        %v723 = vadd.f32 0.0, %v722
        %v724 = vpop.f32.mrb[0].mxu0
        %725 = vmatprep.mubr.bf16.mxu0 %v450
        %726 = vmatmul.mubr.bf16.gmra.mrb[0].mxu0 %v449
        %v727 = vpop.f32.mrb[0].mxu0
        %v728 = vadd.f32 0.0, %v727
        %v729 = vpop.f32.mrb[0].mxu0
        %v730 = vpop.f32.mrb[0].mxu0
        %v731 = vadd.f32 0.0, %v730
        %v732 = vpop.f32.mrb[0].mxu0
        %733 = vmatprep.mubr.bf16.mxu0 %v452
        %734 = vmatmul.mubr.bf16.gmra.mrb[0].mxu0 %v451
        %v735 = vpop.f32.mrb[0].mxu0
        %v736 = vadd.f32 0.0, %v735
        %v737 = vpop.f32.mrb[0].mxu0
        %v738 = vpop.f32.mrb[0].mxu0
        %v739 = vadd.f32 0.0, %v738
        %v740 = vpop.f32.mrb[0].mxu0
        %741 = vdwg.mxu0
        %p742 = scmp.eq.s32.totalorder %s27, 0
        // Predicated region
        $region45: #{tpu_custom_call.1} parent=35 // pred_check
          %p743 = pneg %p742
        $region46: #{tpu_custom_call.1} parent=35 // pred_check_branch
          %745 = sbr.rel (%p743) target = $region48
        $region47: #{tpu_custom_call.1} parent=35 // pred_region
          %746 = vst [vmem:[%s255] sm:$0xff] %v616
          %747 = vst [vmem:[%s255 + $0x8] sm:$0xff] %v619
          %748 = vst [vmem:[%s255 + $0x10] sm:$0xff] %v624
          %749 = vst [vmem:[%s255 + $0x18] sm:$0xff] %v627
          %750 = vst [vmem:[%s255 + $0x20] sm:$0xff] %v632
          %751 = vst [vmem:[%s255 + $0x28] sm:$0xff] %v635
          %752 = vst [vmem:[%s255 + $0x30] sm:$0xff] %v640
          %753 = vst [vmem:[%s255 + $0x38] sm:$0xff] %v643
          %754 = vst [vmem:[%s255 + $0x40] sm:$0xff] %v648
          %755 = vst [vmem:[%s255 + $0x48] sm:$0xff] %v651
          %756 = vst [vmem:[%s255 + $0x50] sm:$0xff] %v656
          %757 = vst [vmem:[%s255 + $0x58] sm:$0xff] %v659
          %758 = vst [vmem:[%s255 + $0x60] sm:$0xff] %v664
          %759 = vst [vmem:[%s255 + $0x68] sm:$0xff] %v667
          %760 = vst [vmem:[%s255 + $0x70] sm:$0xff] %v672
          %761 = vst [vmem:[%s255 + $0x78] sm:$0xff] %v675
          %762 = vst [vmem:[%s255 + $0x80] sm:$0xff] %v680
          %763 = vst [vmem:[%s255 + $0x88] sm:$0xff] %v683
          %764 = vst [vmem:[%s255 + $0x90] sm:$0xff] %v688
          %765 = vst [vmem:[%s255 + $0x98] sm:$0xff] %v691
          %766 = vst [vmem:[%s255 + $0xa0] sm:$0xff] %v696
          %767 = vst [vmem:[%s255 + $0xa8] sm:$0xff] %v699
          %768 = vst [vmem:[%s255 + $0xb0] sm:$0xff] %v704
          %769 = vst [vmem:[%s255 + $0xb8] sm:$0xff] %v707
          %770 = vst [vmem:[%s255 + $0xc0] sm:$0xff] %v712
          %771 = vst [vmem:[%s255 + $0xc8] sm:$0xff] %v715
          %772 = vst [vmem:[%s255 + $0xd0] sm:$0xff] %v720
          %773 = vst [vmem:[%s255 + $0xd8] sm:$0xff] %v723
          %774 = vst [vmem:[%s255 + $0xe0] sm:$0xff] %v728
          %775 = vst [vmem:[%s255 + $0xe8] sm:$0xff] %v731
          %776 = vst [vmem:[%s255 + $0xf0] sm:$0xff] %v736
          %777 = vst [vmem:[%s255 + $0xf8] sm:$0xff] %v739
        $region48: #{tpu_custom_call.1} parent=35 // pred_fallthru
          _
        %p778 = scmp.gt.s32.totalorder %s27, 0
        // Predicated region
        $region49: #{tpu_custom_call.1} parent=35 // pred_check
          %p779 = pneg %p778
        $region50: #{tpu_custom_call.1} parent=35 // pred_check_branch
          %781 = sbr.rel (%p779) target = $region52
        $region51: #{tpu_custom_call.1} parent=35 // pred_region
          %v782 = vld [vmem:[%s255] sm:$0xff]
          %v783 = vld [vmem:[%s255 + $0x8] sm:$0xff]
          %v784 = vld [vmem:[%s255 + $0x10] sm:$0xff]
          %v785 = vld [vmem:[%s255 + $0x18] sm:$0xff]
          %v786 = vld [vmem:[%s255 + $0x20] sm:$0xff]
          %v787 = vld [vmem:[%s255 + $0x28] sm:$0xff]
          %v788 = vld [vmem:[%s255 + $0x30] sm:$0xff]
          %v789 = vld [vmem:[%s255 + $0x38] sm:$0xff]
          %v790 = vld [vmem:[%s255 + $0x40] sm:$0xff]
          %v791 = vld [vmem:[%s255 + $0x48] sm:$0xff]
          %v792 = vld [vmem:[%s255 + $0x50] sm:$0xff]
          %v793 = vld [vmem:[%s255 + $0x58] sm:$0xff]
          %v794 = vld [vmem:[%s255 + $0x60] sm:$0xff]
          %v795 = vld [vmem:[%s255 + $0x68] sm:$0xff]
          %v796 = vld [vmem:[%s255 + $0x70] sm:$0xff]
          %v797 = vld [vmem:[%s255 + $0x78] sm:$0xff]
          %v798 = vld [vmem:[%s255 + $0x80] sm:$0xff]
          %v799 = vld [vmem:[%s255 + $0x88] sm:$0xff]
          %v800 = vld [vmem:[%s255 + $0x90] sm:$0xff]
          %v801 = vld [vmem:[%s255 + $0x98] sm:$0xff]
          %v802 = vld [vmem:[%s255 + $0xa0] sm:$0xff]
          %v803 = vld [vmem:[%s255 + $0xa8] sm:$0xff]
          %v804 = vld [vmem:[%s255 + $0xb0] sm:$0xff]
          %v805 = vld [vmem:[%s255 + $0xb8] sm:$0xff]
          %v806 = vld [vmem:[%s255 + $0xc0] sm:$0xff]
          %v807 = vld [vmem:[%s255 + $0xc8] sm:$0xff]
          %v808 = vld [vmem:[%s255 + $0xd0] sm:$0xff]
          %v809 = vld [vmem:[%s255 + $0xd8] sm:$0xff]
          %v810 = vld [vmem:[%s255 + $0xe0] sm:$0xff]
          %v811 = vld [vmem:[%s255 + $0xe8] sm:$0xff]
          %v812 = vld [vmem:[%s255 + $0xf0] sm:$0xff]
          %v813 = vld [vmem:[%s255 + $0xf8] sm:$0xff]
          %v814 = vadd.f32 %v782, %v616
          %v815 = vadd.f32 %v783, %v619
          %v816 = vadd.f32 %v784, %v624
          %v817 = vadd.f32 %v785, %v627
          %v818 = vadd.f32 %v786, %v632
          %v819 = vadd.f32 %v787, %v635
          %v820 = vadd.f32 %v788, %v640
          %v821 = vadd.f32 %v789, %v643
          %v822 = vadd.f32 %v790, %v648
          %v823 = vadd.f32 %v791, %v651
          %v824 = vadd.f32 %v792, %v656
          %v825 = vadd.f32 %v793, %v659
          %v826 = vadd.f32 %v794, %v664
          %v827 = vadd.f32 %v795, %v667
          %v828 = vadd.f32 %v796, %v672
          %v829 = vadd.f32 %v797, %v675
          %v830 = vadd.f32 %v798, %v680
          %v831 = vadd.f32 %v799, %v683
          %v832 = vadd.f32 %v800, %v688
          %v833 = vadd.f32 %v801, %v691
          %v834 = vadd.f32 %v802, %v696
          %v835 = vadd.f32 %v803, %v699
          %v836 = vadd.f32 %v804, %v704
          %v837 = vadd.f32 %v805, %v707
          %v838 = vadd.f32 %v806, %v712
          %v839 = vadd.f32 %v807, %v715
          %v840 = vadd.f32 %v808, %v720
          %v841 = vadd.f32 %v809, %v723
          %v842 = vadd.f32 %v810, %v728
          %v843 = vadd.f32 %v811, %v731
          %v844 = vadd.f32 %v812, %v736
          %v845 = vadd.f32 %v813, %v739
          %846 = vst [vmem:[%s255] sm:$0xff] %v814
          %847 = vst [vmem:[%s255 + $0x8] sm:$0xff] %v815
          %848 = vst [vmem:[%s255 + $0x10] sm:$0xff] %v816
          %849 = vst [vmem:[%s255 + $0x18] sm:$0xff] %v817
          %850 = vst [vmem:[%s255 + $0x20] sm:$0xff] %v818
          %851 = vst [vmem:[%s255 + $0x28] sm:$0xff] %v819
          %852 = vst [vmem:[%s255 + $0x30] sm:$0xff] %v820
          %853 = vst [vmem:[%s255 + $0x38] sm:$0xff] %v821
          %854 = vst [vmem:[%s255 + $0x40] sm:$0xff] %v822
          %855 = vst [vmem:[%s255 + $0x48] sm:$0xff] %v823
          %856 = vst [vmem:[%s255 + $0x50] sm:$0xff] %v824
          %857 = vst [vmem:[%s255 + $0x58] sm:$0xff] %v825
          %858 = vst [vmem:[%s255 + $0x60] sm:$0xff] %v826
          %859 = vst [vmem:[%s255 + $0x68] sm:$0xff] %v827
          %860 = vst [vmem:[%s255 + $0x70] sm:$0xff] %v828
          %861 = vst [vmem:[%s255 + $0x78] sm:$0xff] %v829
          %862 = vst [vmem:[%s255 + $0x80] sm:$0xff] %v830
          %863 = vst [vmem:[%s255 + $0x88] sm:$0xff] %v831
          %864 = vst [vmem:[%s255 + $0x90] sm:$0xff] %v832
          %865 = vst [vmem:[%s255 + $0x98] sm:$0xff] %v833
          %866 = vst [vmem:[%s255 + $0xa0] sm:$0xff] %v834
          %867 = vst [vmem:[%s255 + $0xa8] sm:$0xff] %v835
          %868 = vst [vmem:[%s255 + $0xb0] sm:$0xff] %v836
          %869 = vst [vmem:[%s255 + $0xb8] sm:$0xff] %v837
          %870 = vst [vmem:[%s255 + $0xc0] sm:$0xff] %v838
          %871 = vst [vmem:[%s255 + $0xc8] sm:$0xff] %v839
          %872 = vst [vmem:[%s255 + $0xd0] sm:$0xff] %v840
          %873 = vst [vmem:[%s255 + $0xd8] sm:$0xff] %v841
          %874 = vst [vmem:[%s255 + $0xe0] sm:$0xff] %v842
          %875 = vst [vmem:[%s255 + $0xe8] sm:$0xff] %v843
          %876 = vst [vmem:[%s255 + $0xf0] sm:$0xff] %v844
          %877 = vst [vmem:[%s255 + $0xf8] sm:$0xff] %v845
        $region52: #{tpu_custom_call.1} parent=35 // pred_fallthru
          _
        // Predicated region
        $region53: #{tpu_custom_call.1} parent=35 // pred_check
          %p878 = pneg %p742
        $region54: #{tpu_custom_call.1} parent=35 // pred_check_branch
          %880 = sbr.rel (%p878) target = $region56
        $region55: #{tpu_custom_call.1} parent=35 // pred_region
          %v881 = vld [vmem:[%s255] sm:$0xff]
          %v882 = vld [vmem:[%s255 + $0x8] sm:$0xff]
          %v883 = vld [vmem:[%s255 + $0x10] sm:$0xff]
          %v884 = vld [vmem:[%s255 + $0x18] sm:$0xff]
          %v885 = vld [vmem:[%s255 + $0x20] sm:$0xff]
          %v886 = vld [vmem:[%s255 + $0x28] sm:$0xff]
          %v887 = vld [vmem:[%s255 + $0x30] sm:$0xff]
          %v888 = vld [vmem:[%s255 + $0x38] sm:$0xff]
          %v889 = vld [vmem:[%s255 + $0x40] sm:$0xff]
          %v890 = vld [vmem:[%s255 + $0x48] sm:$0xff]
          %v891 = vld [vmem:[%s255 + $0x50] sm:$0xff]
          %v892 = vld [vmem:[%s255 + $0x58] sm:$0xff]
          %v893 = vld [vmem:[%s255 + $0x60] sm:$0xff]
          %v894 = vld [vmem:[%s255 + $0x68] sm:$0xff]
          %v895 = vld [vmem:[%s255 + $0x70] sm:$0xff]
          %v896 = vld [vmem:[%s255 + $0x78] sm:$0xff]
          %v897 = vld [vmem:[%s255 + $0x80] sm:$0xff]
          %v898 = vld [vmem:[%s255 + $0x88] sm:$0xff]
          %v899 = vld [vmem:[%s255 + $0x90] sm:$0xff]
          %v900 = vld [vmem:[%s255 + $0x98] sm:$0xff]
          %v901 = vld [vmem:[%s255 + $0xa0] sm:$0xff]
          %v902 = vld [vmem:[%s255 + $0xa8] sm:$0xff]
          %v903 = vld [vmem:[%s255 + $0xb0] sm:$0xff]
          %v904 = vld [vmem:[%s255 + $0xb8] sm:$0xff]
          %v905 = vld [vmem:[%s255 + $0xc0] sm:$0xff]
          %v906 = vld [vmem:[%s255 + $0xc8] sm:$0xff]
          %v907 = vld [vmem:[%s255 + $0xd0] sm:$0xff]
          %v908 = vld [vmem:[%s255 + $0xd8] sm:$0xff]
          %v909 = vld [vmem:[%s255 + $0xe0] sm:$0xff]
          %v910 = vld [vmem:[%s255 + $0xe8] sm:$0xff]
          %v911 = vld [vmem:[%s255 + $0xf0] sm:$0xff]
          %v912 = vld [vmem:[%s255 + $0xf8] sm:$0xff]
          %v913 = vld [vmem:[%s2] sm:$0x1]
          %v915 = vlaneseq
          %v916 = vshrl.u32 %v915, 7
          %v917 = vsub.s32 0, %v916
          %v918 = vrot.slane %v913, %v917
          %v920 = vmul.f32 %v881, %v918
          %v921 = vmul.f32 %v882, %v918
          %v922 = vmul.f32 %v883, %v918
          %v923 = vmul.f32 %v884, %v918
          %v924 = vmul.f32 %v885, %v918
          %v925 = vmul.f32 %v886, %v918
          %v926 = vmul.f32 %v887, %v918
          %v927 = vmul.f32 %v888, %v918
          %v928 = vmul.f32 %v889, %v918
          %v929 = vmul.f32 %v890, %v918
          %v930 = vmul.f32 %v891, %v918
          %v931 = vmul.f32 %v892, %v918
          %v932 = vmul.f32 %v893, %v918
          %v933 = vmul.f32 %v894, %v918
          %v934 = vmul.f32 %v895, %v918
          %v935 = vmul.f32 %v896, %v918
          %v936 = vmul.f32 %v897, %v918
          %v937 = vmul.f32 %v898, %v918
          %v938 = vmul.f32 %v899, %v918
          %v939 = vmul.f32 %v900, %v918
          %v940 = vmul.f32 %v901, %v918
          %v941 = vmul.f32 %v902, %v918
          %v942 = vmul.f32 %v903, %v918
          %v943 = vmul.f32 %v904, %v918
          %v944 = vmul.f32 %v905, %v918
          %v945 = vmul.f32 %v906, %v918
          %v946 = vmul.f32 %v907, %v918
          %v947 = vmul.f32 %v908, %v918
          %v948 = vmul.f32 %v909, %v918
          %v949 = vmul.f32 %v910, %v918
          %v950 = vmul.f32 %v911, %v918
          %v951 = vmul.f32 %v912, %v918
          %v952 = vld [vmem:[%s3] sm:$0x1]
          %v954 = vlaneseq
          %v955 = vshrl.u32 %v954, 7
          %v956 = vsub.s32 0, %v955
          %v957 = vrot.slane %v952, %v956
          %v959 = vadd.f32 %v920, %v957
          %v960 = vadd.f32 %v921, %v957
          %v961 = vadd.f32 %v922, %v957
          %v962 = vadd.f32 %v923, %v957
          %v963 = vadd.f32 %v924, %v957
          %v964 = vadd.f32 %v925, %v957
          %v965 = vadd.f32 %v926, %v957
          %v966 = vadd.f32 %v927, %v957
          %v967 = vadd.f32 %v928, %v957
          %v968 = vadd.f32 %v929, %v957
          %v969 = vadd.f32 %v930, %v957
          %v970 = vadd.f32 %v931, %v957
          %v971 = vadd.f32 %v932, %v957
          %v972 = vadd.f32 %v933, %v957
          %v973 = vadd.f32 %v934, %v957
          %v974 = vadd.f32 %v935, %v957
          %v975 = vadd.f32 %v936, %v957
          %v976 = vadd.f32 %v937, %v957
          %v977 = vadd.f32 %v938, %v957
          %v978 = vadd.f32 %v939, %v957
          %v979 = vadd.f32 %v940, %v957
          %v980 = vadd.f32 %v941, %v957
          %v981 = vadd.f32 %v942, %v957
          %v982 = vadd.f32 %v943, %v957
          %v983 = vadd.f32 %v944, %v957
          %v984 = vadd.f32 %v945, %v957
          %v985 = vadd.f32 %v946, %v957
          %v986 = vadd.f32 %v947, %v957
          %v987 = vadd.f32 %v948, %v957
          %v988 = vadd.f32 %v949, %v957
          %v989 = vadd.f32 %v950, %v957
          %v990 = vadd.f32 %v951, %v957
          %v991 = vmax.f32 %v959, 0.0
          %v992 = vmax.f32 %v960, 0.0
          %v993 = vmax.f32 %v961, 0.0
          %v994 = vmax.f32 %v962, 0.0
          %v995 = vmax.f32 %v963, 0.0
          %v996 = vmax.f32 %v964, 0.0
          %v997 = vmax.f32 %v965, 0.0
          %v998 = vmax.f32 %v966, 0.0
          %v999 = vmax.f32 %v967, 0.0
          %v1000 = vmax.f32 %v968, 0.0
          %v1001 = vmax.f32 %v969, 0.0
          %v1002 = vmax.f32 %v970, 0.0
          %v1003 = vmax.f32 %v971, 0.0
          %v1004 = vmax.f32 %v972, 0.0
          %v1005 = vmax.f32 %v973, 0.0
          %v1006 = vmax.f32 %v974, 0.0
          %v1007 = vmax.f32 %v975, 0.0
          %v1008 = vmax.f32 %v976, 0.0
          %v1009 = vmax.f32 %v977, 0.0
          %v1010 = vmax.f32 %v978, 0.0
          %v1011 = vmax.f32 %v979, 0.0
          %v1012 = vmax.f32 %v980, 0.0
          %v1013 = vmax.f32 %v981, 0.0
          %v1014 = vmax.f32 %v982, 0.0
          %v1015 = vmax.f32 %v983, 0.0
          %v1016 = vmax.f32 %v984, 0.0
          %v1017 = vmax.f32 %v985, 0.0
          %v1018 = vmax.f32 %v986, 0.0
          %v1019 = vmax.f32 %v987, 0.0
          %v1020 = vmax.f32 %v988, 0.0
          %v1021 = vmax.f32 %v989, 0.0
          %v1022 = vmax.f32 %v990, 0.0
          %1023 = vst [vmem:[%s255] sm:$0xff] %v991
          %1024 = vst [vmem:[%s255 + $0x8] sm:$0xff] %v992
          %1025 = vst [vmem:[%s255 + $0x10] sm:$0xff] %v993
          %1026 = vst [vmem:[%s255 + $0x18] sm:$0xff] %v994
          %1027 = vst [vmem:[%s255 + $0x20] sm:$0xff] %v995
          %1028 = vst [vmem:[%s255 + $0x28] sm:$0xff] %v996
          %1029 = vst [vmem:[%s255 + $0x30] sm:$0xff] %v997
          %1030 = vst [vmem:[%s255 + $0x38] sm:$0xff] %v998
          %1031 = vst [vmem:[%s255 + $0x40] sm:$0xff] %v999
          %1032 = vst [vmem:[%s255 + $0x48] sm:$0xff] %v1000
          %1033 = vst [vmem:[%s255 + $0x50] sm:$0xff] %v1001
          %1034 = vst [vmem:[%s255 + $0x58] sm:$0xff] %v1002
          %1035 = vst [vmem:[%s255 + $0x60] sm:$0xff] %v1003
          %1036 = vst [vmem:[%s255 + $0x68] sm:$0xff] %v1004
          %1037 = vst [vmem:[%s255 + $0x70] sm:$0xff] %v1005
          %1038 = vst [vmem:[%s255 + $0x78] sm:$0xff] %v1006
          %1039 = vst [vmem:[%s255 + $0x80] sm:$0xff] %v1007
          %1040 = vst [vmem:[%s255 + $0x88] sm:$0xff] %v1008
          %1041 = vst [vmem:[%s255 + $0x90] sm:$0xff] %v1009
          %1042 = vst [vmem:[%s255 + $0x98] sm:$0xff] %v1010
          %1043 = vst [vmem:[%s255 + $0xa0] sm:$0xff] %v1011
          %1044 = vst [vmem:[%s255 + $0xa8] sm:$0xff] %v1012
          %1045 = vst [vmem:[%s255 + $0xb0] sm:$0xff] %v1013
          %1046 = vst [vmem:[%s255 + $0xb8] sm:$0xff] %v1014
          %1047 = vst [vmem:[%s255 + $0xc0] sm:$0xff] %v1015
          %1048 = vst [vmem:[%s255 + $0xc8] sm:$0xff] %v1016
          %1049 = vst [vmem:[%s255 + $0xd0] sm:$0xff] %v1017
          %1050 = vst [vmem:[%s255 + $0xd8] sm:$0xff] %v1018
          %1051 = vst [vmem:[%s255 + $0xe0] sm:$0xff] %v1019
          %1052 = vst [vmem:[%s255 + $0xe8] sm:$0xff] %v1020
          %1053 = vst [vmem:[%s255 + $0xf0] sm:$0xff] %v1021
          %1054 = vst [vmem:[%s255 + $0xf8] sm:$0xff] %v1022
        $region56: #{tpu_custom_call.1} parent=35 // pred_fallthru
          _
        %s1055 = sand.u32 %s138, 1
        %s1056 = scalar_lea.sflag [#allocation4], %s1055
        %s1057 = sand.u32 %s138, 1
        %s1058 = smul.addr %s1057, 256
        %s1059 = scalar_lea.vmem [#allocation7], %s1058
        // Predicated region
        $region57: #{tpu_custom_call.1} parent=35 // pred_check
          %p1060 = pneg %p148
        $region58: #{tpu_custom_call.1} parent=35 // pred_check_branch
          %1062 = sbr.rel (%p1060) target = $region60
        $region59: #{tpu_custom_call.1} parent=35 // pred_region
          %s1063 = smul.u32 32, %s26
          %s1065 = ssub.s32 4096, 4096
          %1066 = vsyncadd %s1056, %s1065
          %s1067 = smul.addr %s1063, 128
          %s1068 = scalar_lea.hbm %s4, %s1067
          %s1069 = sshll.u32 %s1059, 4
          %s1070 = int_to_ptr.vmem [resolvable:$true] %s1069
          %1075 = dma.vmem_to_hbm [thread:$0]  %s1070, 4096, %s1068, %s1056, 128, 128, 8
        $region60: #{tpu_custom_call.1} parent=35 // pred_fallthru
          _
      $region36: #{tpu_custom_call.1} parent=5 // pred_fallthru
        _
      %p1076 = scmp.le.s32.totalorder 2, %s17
      // Predicated region
      $region61: #{tpu_custom_call.1} parent=5 // pred_check
        %p1077 = pneg %p1076
      $region62: #{tpu_custom_call.1} parent=5 // pred_check_branch
        %1079 = sbr.rel (%p1077) target = $region64
      $region63: #{tpu_custom_call.1} parent=5 // pred_region
        %s1080 = ssub.s32 %s17, 2
        // Predicated region
        $region65: #{tpu_custom_call.1} parent=63 // pred_check
          %p1081 = pneg %p154
        $region66: #{tpu_custom_call.1} parent=63 // pred_check_branch
          %1083 = sbr.rel (%p1081) target = $region68
        $region67: #{tpu_custom_call.1} parent=63 // pred_region
          %s1084 = sand.u32 %s139, 1
          %s1085 = scalar_lea.sflag [#allocation4], %s1084
          %s1086 = sand.u32 %s139, 1
          %s1087 = smul.addr %s1086, 256
          %s1088 = scalar_lea.vmem [#allocation7], %s1087
          %1089 = dma.done %s1085, 4096
        $region68: #{tpu_custom_call.1} parent=63 // pred_fallthru
          _
      $region64: #{tpu_custom_call.1} parent=5 // pred_fallthru
        _
    $region6: #{tpu_custom_call.1} parent=1 // loop_footer
      %s21 = sadd.s32 1, %s17
    $region7: #{tpu_custom_call.1} parent=1 // loop_footer_branch
      %16 = sbr.rel target = $region3
    $region8: #{tpu_custom_call.1} parent=1 // loop_exit
      _
    %1090 = vsyncpa [#allocation3], 1
    %s1091 = scalar_lea.sflag [#allocation3], 1
    %1092 = vsyncpa %s1091, 1
    %1093 = vsyncpa [#allocation6], 1
    %1094 = vsyncpa [#allocation4], 1
    %s1095 = scalar_lea.sflag [#allocation4], 1
    %1096 = vsyncpa %s1095, 1

</llo_original>
